<compile_context>
chip_gen: v5e
topology: v5e:2x2
jax: 0.10.0
libtpu: 0.0.40
codegen_flags: <defaults>
</compile_context>

<pallas_src>
import functools

import jax
import jax.numpy as jnp
from jax import lax
from jax.experimental import pallas as pl
from jax.experimental.pallas import tpu as pltpu

EPSILON = 2.0

_LANE = 128
_SUBLANE = 8
_MAX_CORES = 2          # leading "parallel" axis; harmless if serialized on 1-TC chips
_MAX_TILE_ROWS = 8192


def _round_up(x, m):
    return (x + m - 1) // m * m


def _tile_config(n, c, itemsize):
    """Pick row-tile size and scoped-VMEM limit for the current TPU generation."""
    try:
        vmem_cap = int(pltpu.get_tpu_info().vmem_capacity_bytes)
    except Exception:  # be robust if the query is unavailable
        vmem_cap = 64 << 20
    if vmem_cap >= (100 << 20):     # v5e / v6e: 128 MiB physical VMEM
        vmem_limit = 64 << 20
        budget = 44 << 20
    else:                           # v7x: 64 MiB physical VMEM per TensorCore
        vmem_limit = 40 << 20
        budget = 28 << 20

    c_lanes = _round_up(c, _LANE)   # VMEM lane-layout estimate (array itself is NOT padded)
    per_row = (2 * c_lanes * itemsize   # double-buffered input logits tile
               + 16 * c_lanes           # ~4 live full-width f32 intermediates
               + 2 * _LANE * 4)         # double-buffered lane-padded (TN,1) int32 targets
    tile_rows = budget // per_row
    tile_rows = int(min(max(tile_rows, _SUBLANE), _MAX_TILE_ROWS, _round_up(n, _SUBLANE)))
    tile_rows = _round_up(tile_rows, _SUBLANE)
    return tile_rows, vmem_limit


def _poly_loss_kernel(x_ref, t_ref, o_ref, acc_ref, *,
                      n_rows, tile_rows, tiles_per_core, epsilon):
    core = pl.program_id(0)      # "parallel" axis (2-way split where supported)
    step = pl.program_id(1)      # "arbitrary" reduction over row tiles

    @pl.when(step == 0)
    def _init():
        acc_ref[...] = jnp.zeros_like(acc_ref)

    x_raw = x_ref[...]           # (TN, C) in the caller's dtype (f32 or bf16)
    t = t_ref[...]               # (TN, 1) int32
    tn, c = x_raw.shape

    # Row max in the native dtype (exact; halves XLU bytes for bf16), then one cast.
    m = jnp.max(x_raw, axis=1, keepdims=True).astype(jnp.float32)     # (TN, 1)
    xm = x_raw.astype(jnp.float32) - m                                # (TN, C) f32

    col = lax.broadcasted_iota(jnp.int32, (tn, c), 1)
    is_true = col == t                                                # one-hot of target

    e = jnp.exp(xm)
    sumexp = jnp.sum(e, axis=1, keepdims=True)                        # (TN, 1)
    xt = jnp.sum(jnp.where(is_true, xm, 0.0), axis=1, keepdims=True)  # x_true - m

    ce = jnp.log(sumexp) - xt            # -log softmax[target]
    pt = jnp.exp(-ce)                    # softmax[target]  (narrow column; EUP slot)
    loss = ce + epsilon * (1.0 - pt)     # (TN, 1)

    # Zero rows whose *unclamped* global index is past the real batch: covers both
    # the ragged last block's garbage rows and clamped duplicate blocks.
    blk = core * tiles_per_core + step
    row = lax.broadcasted_iota(jnp.int32, (tn, 1), 0) + blk * tile_rows
    loss = jnp.where(row < n_rows, loss, 0.0)

    acc_ref[...] += jnp.sum(loss, axis=0, keepdims=True)              # (1, 1)

    @pl.when(step == tiles_per_core - 1)
    def _fin():
        o_ref[...] = jnp.broadcast_to(acc_ref[...], o_ref.shape)


def poly_loss(outputs, targets, *, epsilon=EPSILON, tile_rows=None):
    """outputs: (N, C) float (f32 or bf16), targets: (N,) int -> scalar f32 loss."""
    n, c = outputs.shape
    itemsize = jnp.dtype(outputs.dtype).itemsize

    auto_rows, vmem_limit = _tile_config(n, c, itemsize)
    if tile_rows is None:
        tile_rows = auto_rows
    else:
        tile_rows = _round_up(max(int(tile_rows), _SUBLANE), _SUBLANE)

    tiles = -(-n // tile_rows)
    ncores = _MAX_CORES if tiles >= _MAX_CORES else 1
    tiles_per_core = -(-tiles // ncores)
    last_blk = tiles - 1

    t = targets.astype(jnp.int32).reshape(n, 1)

    def row_block(cc, i):
        # Clamp so no block starts past the array end; duplicate / ragged-tail rows
        # are zeroed in-kernel by the global-row mask.
        return (jnp.minimum(cc * tiles_per_core + i, last_blk), 0)

    kernel = functools.partial(
        _poly_loss_kernel,
        n_rows=n, tile_rows=tile_rows,
        tiles_per_core=tiles_per_core, epsilon=float(epsilon))

    out = pl.pallas_call(
        kernel,
        out_shape=jax.ShapeDtypeStruct((ncores * _SUBLANE, _LANE), jnp.float32),
        grid_spec=pltpu.PrefetchScalarGridSpec(
            num_scalar_prefetch=0,
            grid=(ncores, tiles_per_core),
            in_specs=[
                pl.BlockSpec((tile_rows, c), row_block),   # full-C block: no class pad
                pl.BlockSpec((tile_rows, 1), row_block),
            ],
            out_specs=pl.BlockSpec((_SUBLANE, _LANE), lambda cc, i: (cc, 0)),
            scratch_shapes=[pltpu.VMEM((1, 1), jnp.float32)],
        ),
        compiler_params=pltpu.CompilerParams(
            dimension_semantics=("parallel", "arbitrary"),
            vmem_limit_bytes=vmem_limit),
    )(outputs, t)

    # Each (8,128) per-core tile is filled with that core's partial sum.
    partials = out.reshape(ncores, _SUBLANE, _LANE)[:, 0, 0]
    return jnp.sum(partials) / jnp.float32(n)


def poly_loss_ref(outputs, targets, epsilon=EPSILON):
    # Pure-JAX reference mirroring the PyTorch forward.
    x = outputs.astype(jnp.float32)
    logp = jax.nn.log_softmax(x, axis=1)
    ce = -jnp.mean(jnp.take_along_axis(logp, targets[:, None], axis=1)[:, 0])
    pt = jnp.sum(jax.nn.one_hot(targets, x.shape[1]) * jax.nn.softmax(x, axis=1),
                 axis=1)
    return jnp.mean(ce + epsilon * (1.0 - pt))


if __name__ == "__main__":
    key = jax.random.PRNGKey(0)
    k1, k2, k3, k4, k5, k6 = jax.random.split(key, 6)

    # Case 1: small single-tile problem (no padding anywhere).
    n1, c1 = 8, 32
    logits1 = jax.random.normal(k1, (n1, c1), dtype=jnp.float32)
    labels1 = jax.random.randint(k2, (n1,), 0, c1, dtype=jnp.int32)
    got1 = jax.block_until_ready(poly_loss(logits1, labels1))
    ref1 = jax.block_until_ready(poly_loss_ref(logits1, labels1))
    assert jnp.allclose(got1, ref1, atol=1e-5, rtol=1e-5), (got1, ref1)

    # Case 2: odd tile count -> exercises 2-core split, ragged last block, and
    # clamped duplicate-block masking (n=40, tile_rows=16 -> 3 tiles over 2 cores).
    n2, c2 = 40, 10
    logits2 = jax.random.normal(k3, (n2, c2), dtype=jnp.float32)
    labels2 = jax.random.randint(k4, (n2,), 0, c2, dtype=jnp.int32)
    got2 = jax.block_until_ready(poly_loss(logits2, labels2, tile_rows=16))
    ref2 = jax.block_until_ready(poly_loss_ref(logits2, labels2))
    assert jnp.allclose(got2, ref2, atol=1e-5, rtol=1e-5), (got2, ref2)

    # Case 3: bf16 inputs pass through in bf16 (native-dtype row max path).
    n3, c3 = 64, 100
    logits3 = jax.random.normal(k5, (n3, c3), dtype=jnp.bfloat16)
    labels3 = jax.random.randint(k6, (n3,), 0, c3, dtype=jnp.int32)
    got3 = jax.block_until_ready(poly_loss(logits3, labels3, tile_rows=16))
    ref3 = jax.block_until_ready(poly_loss_ref(logits3, labels3))
    assert jnp.allclose(got3, ref3, atol=1e-4, rtol=1e-4), (got3, ref3)

    print("KERNEL_OK")
</pallas_src>

<mosaic_0001>
module attributes {stable_mosaic.version = 11 : i64} {
  func.func @_poly_loss_kernel(%arg0: i32, %arg1: i32, %arg2: memref<8x32xf32, #tpu.memory_space<vmem>>, %arg3: memref<8x1xi32, #tpu.memory_space<vmem>>, %arg4: memref<8x128xf32, #tpu.memory_space<vmem>>, %arg5: memref<1x1xf32, #tpu.memory_space<vmem>>) attributes {dimension_semantics = [#tpu.dimension_semantics<parallel>, #tpu.dimension_semantics<arbitrary>], iteration_bounds = array<i64: 1, 1>, scalar_prefetch = 0 : i64, scratch_operands = 1 : i64, tpu.core_type = #tpu.core_type<tc>, window_params = [{transform_indices = @transform_0, window_bounds = array<i64: 8, 32>}, {transform_indices = @transform_1, window_bounds = array<i64: 8, 1>}, {transform_indices = @transform_2, window_bounds = array<i64: 8, 128>}]} {
    %c0_i32 = arith.constant 0 : i32
    %0 = arith.cmpi eq, %arg1, %c0_i32 : i32
    %1 = arith.extui %0 : i1 to i32
    %c0_i32_0 = arith.constant 0 : i32
    %2 = arith.cmpi ne, %1, %c0_i32_0 : i32
    scf.if %2 {
      %cst_19 = arith.constant 0.000000e+00 : f32
      %47 = vector.broadcast %cst_19 : f32 to vector<1x1xf32>
      %c0_20 = arith.constant 0 : index
      %c0_21 = arith.constant 0 : index
      %48 = vector.load %arg5[%c0_20, %c0_21] : memref<1x1xf32, #tpu.memory_space<vmem>>, vector<1x1xf32>
      tpu.vector_store %arg5[%c0_20, %c0_21], %47 {strides = array<i32>} : memref<1x1xf32, #tpu.memory_space<vmem>>, vector<1x1xf32>,
    } else {
    }
    %c0 = arith.constant 0 : index
    %c0_1 = arith.constant 0 : index
    %3 = vector.load %arg2[%c0, %c0_1] : memref<8x32xf32, #tpu.memory_space<vmem>>, vector<8x32xf32>
    %c0_2 = arith.constant 0 : index
    %c0_3 = arith.constant 0 : index
    %4 = vector.load %arg3[%c0_2, %c0_3] : memref<8x1xi32, #tpu.memory_space<vmem>>, vector<8x1xi32>
    %cst = arith.constant dense<0xFF800000> : vector<8xf32>
    %5 = vector.multi_reduction <maximumf>, %3, %cst [1] : vector<8x32xf32> to vector<8xf32>
    %6 = vector.shape_cast %5 : vector<8xf32> to vector<8x1xf32>
    %7 = vector.broadcast %6 : vector<8x1xf32> to vector<8x32xf32>
    %8 = arith.subf %3, %7 : vector<8x32xf32>
    %9 = tpu.iota {dimensions = array<i32: 1>} : vector<8x32xi32>
    %10 = vector.broadcast %4 : vector<8x1xi32> to vector<8x32xi32>
    %11 = arith.cmpi eq, %9, %10 : vector<8x32xi32>
    %12 = math.exp %8 : vector<8x32xf32>
    %cst_4 = arith.constant dense<0.000000e+00> : vector<8xf32>
    %13 = vector.multi_reduction <add>, %12, %cst_4 [1] : vector<8x32xf32> to vector<8xf32>
    %14 = vector.shape_cast %13 : vector<8xf32> to vector<8x1xf32>
    %cst_5 = arith.constant 0.000000e+00 : f32
    %15 = vector.broadcast %cst_5 : f32 to vector<8x32xf32>
    %16 = arith.select %11, %8, %15 : vector<8x32xi1>, vector<8x32xf32>
    %cst_6 = arith.constant dense<0.000000e+00> : vector<8xf32>
    %17 = vector.multi_reduction <add>, %16, %cst_6 [1] : vector<8x32xf32> to vector<8xf32>
    %18 = vector.shape_cast %17 : vector<8xf32> to vector<8x1xf32>
    %19 = math.log %14 : vector<8x1xf32>
    %20 = arith.subf %19, %18 : vector<8x1xf32>
    %cst_7 = arith.constant 0.000000e+00 : f32
    %21 = vector.broadcast %cst_7 : f32 to vector<8x1xf32>
    %22 = arith.subf %21, %20 : vector<8x1xf32>
    %23 = math.exp %22 : vector<8x1xf32>
    %cst_8 = arith.constant 1.000000e+00 : f32
    %24 = vector.broadcast %cst_8 : f32 to vector<8x1xf32>
    %25 = arith.subf %24, %23 : vector<8x1xf32>
    %cst_9 = arith.constant 2.000000e+00 : f32
    %26 = vector.broadcast %cst_9 : f32 to vector<8x1xf32>
    %27 = arith.mulf %26, %25 : vector<8x1xf32>
    %28 = arith.addf %20, %27 : vector<8x1xf32>
    %c1_i32 = arith.constant 1 : i32
    %29 = arith.muli %arg0, %c1_i32 : i32
    %30 = arith.addi %29, %arg1 : i32
    %31 = tpu.iota {dimensions = array<i32: 0>} : vector<8x1xi32>
    %c8_i32 = arith.constant 8 : i32
    %32 = arith.muli %30, %c8_i32 : i32
    %33 = vector.broadcast %32 : i32 to vector<8x1xi32>
    %34 = arith.addi %31, %33 : vector<8x1xi32>
    %c8_i32_10 = arith.constant 8 : i32
    %35 = vector.broadcast %c8_i32_10 : i32 to vector<8x1xi32>
    %36 = arith.cmpi slt, %34, %35 : vector<8x1xi32>
    %cst_11 = arith.constant 0.000000e+00 : f32
    %37 = vector.broadcast %cst_11 : f32 to vector<8x1xf32>
    %38 = arith.select %36, %28, %37 : vector<8x1xi1>, vector<8x1xf32>
    %c0_12 = arith.constant 0 : index
    %c0_13 = arith.constant 0 : index
    %39 = vector.load %arg5[%c0_12, %c0_13] : memref<1x1xf32, #tpu.memory_space<vmem>>, vector<1x1xf32>
    %cst_14 = arith.constant dense<0.000000e+00> : vector<1xf32>
    %40 = vector.multi_reduction <add>, %38, %cst_14 [0] : vector<8x1xf32> to vector<1xf32>
    %41 = vector.shape_cast %40 : vector<1xf32> to vector<1x1xf32>
    %42 = arith.addf %39, %41 : vector<1x1xf32>
    %c0_15 = arith.constant 0 : index
    %c0_16 = arith.constant 0 : index
    %43 = vector.load %arg5[%c0_15, %c0_16] : memref<1x1xf32, #tpu.memory_space<vmem>>, vector<1x1xf32>
    tpu.vector_store %arg5[%c0_15, %c0_16], %42 {strides = array<i32>} : memref<1x1xf32, #tpu.memory_space<vmem>>, vector<1x1xf32>,
    %c0_i32_17 = arith.constant 0 : i32
    %44 = arith.cmpi eq, %arg1, %c0_i32_17 : i32
    %45 = arith.extui %44 : i1 to i32
    %c0_i32_18 = arith.constant 0 : i32
    %46 = arith.cmpi ne, %45, %c0_i32_18 : i32
    scf.if %46 {
      %c0_19 = arith.constant 0 : index
      %c0_20 = arith.constant 0 : index
      %47 = vector.load %arg5[%c0_19, %c0_20] : memref<1x1xf32, #tpu.memory_space<vmem>>, vector<1x1xf32>
      %48 = vector.shape_cast %47 : vector<1x1xf32> to vector<1x1xf32>
      %49 = vector.broadcast %48 : vector<1x1xf32> to vector<8x128xf32>
      %c0_21 = arith.constant 0 : index
      %c0_22 = arith.constant 0 : index
      %50 = vector.load %arg4[%c0_21, %c0_22] : memref<8x128xf32, #tpu.memory_space<vmem>>, vector<8x128xf32>
      tpu.vector_store %arg4[%c0_21, %c0_22], %49 {strides = array<i32>} : memref<8x128xf32, #tpu.memory_space<vmem>>, vector<8x128xf32>,
    } else {
    }
    return
  }
  func.func @transform_0(%arg0: i32, %arg1: i32) -> (i32, i32) {
    %c1_i32 = arith.constant 1 : i32
    %0 = arith.muli %arg0, %c1_i32 : i32
    %1 = arith.addi %0, %arg1 : i32
    %c0_i32 = arith.constant 0 : i32
    %2 = arith.minsi %1, %c0_i32 : i32
    %c0_i32_0 = arith.constant 0 : i32
    %c0_i32_1 = arith.constant 0 : i32
    return %2, %c0_i32_0 : i32, i32
  }
  func.func @transform_1(%arg0: i32, %arg1: i32) -> (i32, i32) {
    %c1_i32 = arith.constant 1 : i32
    %0 = arith.muli %arg0, %c1_i32 : i32
    %1 = arith.addi %0, %arg1 : i32
    %c0_i32 = arith.constant 0 : i32
    %2 = arith.minsi %1, %c0_i32 : i32
    %c0_i32_0 = arith.constant 0 : i32
    %c0_i32_1 = arith.constant 0 : i32
    return %2, %c0_i32_0 : i32, i32
  }
  func.func @transform_2(%arg0: i32, %arg1: i32) -> (i32, i32) {
    %c0_i32 = arith.constant 0 : i32
    %c0_i32_0 = arith.constant 0 : i32
    return %arg0, %c0_i32 : i32, i32
  }
}

</mosaic_0001>

<llo_original>
// kernel: tpu_custom_call.1
$region0: #{tpu_custom_call.1}
  #allocation0 [shape = 'u32[]', space=smem, size = 0x4, offset = 0x4, fixed_abs, tag = 'smem constant byte address 0x4 - core index']
  #allocation1 [shape = 'u32[72,128]{1,0:T(1,128)}', space=vmem, size = 0x9000, scoped, tag = 'internal scratch']
  #allocation2 [shape = 'f32[1,1]{1,0:T(1,128)}', space=vmem, size = 0x200, scoped, tag = 'scratch operand']
  %s0 = inlined_call_operand.vmem [shape: f32[8,32], index: 0, kind: input, shape index: {}]
  %s1 = inlined_call_operand.vmem [shape: s32[8,1], index: 1, kind: input, shape index: {}]
  %s2 = inlined_call_operand.hbm [shape: f32[8,128], index: 2, kind: output, shape index: {}]
  %s3 = sld [smem:[#allocation0]]
  $region26: #{tpu_custom_call.1} parent=0
    _
  %s5 = ssub.s32 1, %s3
  %s6 = scalar_select 0, %s5, %s3
  $region1: #{tpu_custom_call.1} parent=0
    #allocation3 [shape = 'u8[4096]{0}', space=vmem, size = 0x1000, scoped, tag = 'output window, operand 0, single buffered']
    #allocation4 [shape = 's32[1]{0}', space=sflag, size = 0x4, scoped, tag = 'scoped memory for tpu_custom_call.1']
    %7 = vsyncpa [#allocation4], 0
    // Predicated region
    $region2: #{tpu_custom_call.1} parent=1 // pred_check
      _
    $region3: #{tpu_custom_call.1} parent=1 // pred_check_branch
      %9 = sbr.rel (0) target = $region5
    $region4: #{tpu_custom_call.1} parent=1 // pred_region
      %s10 = sadd.s32 0, 0
      %p11 = scmp.lt.s32.totalorder %s10, 0
      %s12 = scalar_select %p11, %s10, 0
      %p13 = scmp.lt.s32.totalorder %s12, 0
      %s14 = scalar_select %p13, %s12, 0
      %s15 = smul.addr %s14, 8
      %s16 = scalar_lea.vmem %s0, %s15
      %s17 = sadd.s32 0, 0
      %p18 = scmp.lt.s32.totalorder %s17, 0
      %s19 = scalar_select %p18, %s17, 0
    $region5: #{tpu_custom_call.1} parent=1 // pred_fallthru
      _
    // Predicated region
    $region6: #{tpu_custom_call.1} parent=1 // pred_check
      _
    $region7: #{tpu_custom_call.1} parent=1 // pred_check_branch
      %21 = sbr.rel (0) target = $region9
    $region8: #{tpu_custom_call.1} parent=1 // pred_region
      %s22 = sadd.s32 0, 0
      %p23 = scmp.lt.s32.totalorder %s22, 0
      %s24 = scalar_select %p23, %s22, 0
      %p25 = scmp.lt.s32.totalorder %s24, 0
      %s26 = scalar_select %p25, %s24, 0
      %s27 = smul.addr %s26, 8
      %s28 = scalar_lea.vmem %s1, %s27
      %s29 = sadd.s32 0, 0
      %p30 = scmp.lt.s32.totalorder %s29, 0
      %s31 = scalar_select %p30, %s29, 0
    $region9: #{tpu_custom_call.1} parent=1 // pred_fallthru
      _
    %s32 = sadd.s32 0, 0
    %p33 = scmp.lt.s32.totalorder %s32, 0
    %s34 = scalar_select %p33, %s32, 0
    %p35 = scmp.lt.s32.totalorder %s34, 0
    %s36 = scalar_select %p35, %s34, 0
    %s37 = smul.addr %s36, 8
    %s38 = scalar_lea.vmem %s0, %s37
    %s39 = sadd.s32 0, 0
    %p40 = scmp.lt.s32.totalorder %s39, 0
    %s41 = scalar_select %p40, %s39, 0
    %p42 = scmp.lt.s32.totalorder %s41, 0
    %s43 = scalar_select %p42, %s41, 0
    %s44 = smul.addr %s43, 8
    %s45 = scalar_lea.vmem %s1, %s44
    %s46 = sadd.s32 0, 0
    %p47 = scmp.lt.s32.totalorder %s46, 0
    %s48 = scalar_select %p47, %s46, 0
    %p49 = scmp.lt.s32.totalorder %s48, 0
    %s50 = scalar_select %p49, %s48, 0
    %s51 = smul.addr %s50, 8
    %s52 = scalar_lea.vmem %s0, %s51
    %s53 = sadd.s32 0, 0
    %p54 = scmp.lt.s32.totalorder %s53, 0
    %s55 = scalar_select %p54, %s53, 0
    %s56 = sadd.s32 0, 0
    %p57 = scmp.lt.s32.totalorder %s56, 0
    %s58 = scalar_select %p57, %s56, 0
    %p59 = scmp.lt.s32.totalorder %s58, 0
    %s60 = scalar_select %p59, %s58, 0
    %s61 = smul.addr %s60, 8
    %s62 = scalar_lea.vmem %s1, %s61
    %s63 = sadd.s32 0, 0
    %p64 = scmp.lt.s32.totalorder %s63, 0
    %s65 = scalar_select %p64, %s63, 0
    %p66 = scmp.eq.s32.totalorder 0, 0
    // Predicated region
    $region10: #{tpu_custom_call.1} parent=1 // pred_check
      %p67 = pneg %p66
    $region11: #{tpu_custom_call.1} parent=1 // pred_check_branch
      %69 = sbr.rel (%p67) target = $region13
    $region12: #{tpu_custom_call.1} parent=1 // pred_region
      %vm70 = vcmask 0
      %71 = vst.msk [vmem:[#allocation2] sm:$0x1] %vm70, 0.0
    $region13: #{tpu_custom_call.1} parent=1 // pred_fallthru
      _
    %v72 = vld [vmem:[%s52] sm:$0xff]
    %v73 = vld [vmem:[%s62] sm:$0xff]
    %vm74 = vcmask 261120
    %v75 = vsel %vm74, %v72, -inf
    %76 = vmax.xlane.f32.xlu0 %v75
    %v77 = vpop.xlane.xlu0 %76
    %v78 = vsub.f32 %v72, %v77
    %v79 = vlaneseq
    %v80 = vand.u32 %v79, 127
    %81 = vset.pattern.permute.xlu0 0
    %82 = vperm.xlu0 %81, %v73
    %v83 = vpop.permute.xlu0 %82
    %vm84 = vcmp.eq.s32.totalorder %v80, %v83
    %v85 = vmul.f32 %v78, 1.442695
    %v86 = vpow.pop %v85
    %v87 = vsel %vm74, %v86, 0.0
    %88 = vadd.xlane.f32.xlu0 %v87
    %v89 = vpop.xlane.xlu0 %88
    %v90 = vsel %vm84, %v78, 0.0
    %v91 = vsel %vm74, %v90, 0.0
    %92 = vadd.xlane.f32.xlu0 %v91
    %v93 = vpop.xlane.xlu0 %92
    %v94 = vlog2.pop %v89
    %v95 = vmul.f32 %v94, 0.6931472
    %v96 = vsub.f32 %v95, %v93
    %v97 = vsub.f32 0.0, %v96
    %v98 = vmul.f32 %v97, 1.442695
    %v99 = vpow.pop %v98
    %v100 = vsub.f32 1.0, %v99
    %v101 = vmul.f32 %v100, 2.0
    %v102 = vadd.f32 %v96, %v101
    %s103 = sadd.s32 0, 0
    %v104 = vlaneseq
    %v105 = vshrl.u32 %v104, 7
    %s106 = smul.u32 %s103, 8
    %v107 = vstv %s106
    %v108 = vadd.s32 %v105, %v107
    %vm109 = vcmp.lt.s32.totalorder %v108, 8
    %v110 = vsel %vm109, %v102, 0.0
    %v111 = vld [vmem:[#allocation2] sm:$0x1]
    %v112 = vrot.slane %v110, 4
    %v113 = vadd.f32 %v110, %v112
    %v114 = vrot.slane %v113, 2
    %v115 = vadd.f32 %v113, %v114
    %v116 = vrot.slane %v115, 1
    %v117 = vadd.f32 %v115, %v116
    %v118 = vadd.f32 %v111, %v117
    %vm119 = vcmask 0
    %120 = vst.msk [vmem:[#allocation2] sm:$0x1] %vm119, %v118
    // Predicated region
    $region14: #{tpu_custom_call.1} parent=1 // pred_check
      %p121 = pneg %p66
    $region15: #{tpu_custom_call.1} parent=1 // pred_check_branch
      %123 = sbr.rel (%p121) target = $region17
    $region16: #{tpu_custom_call.1} parent=1 // pred_region
      %v124 = vld [vmem:[#allocation2] sm:$0x1]
      %v126 = vperm.slane %v124, 0
      %127 = vset.pattern.permute.xlu0 0
      %128 = vperm.xlu0 %127, %v126
      %v129 = vpop.permute.xlu0 %128
      %131 = vst [vmem:[#allocation3] sm:$0xff] %v129
    $region17: #{tpu_custom_call.1} parent=1 // pred_fallthru
      _
    // Predicated region
    $region18: #{tpu_custom_call.1} parent=1 // pred_check
      _
    $region19: #{tpu_custom_call.1} parent=1 // pred_check_branch
      %133 = sbr.rel (0) target = $region21
    $region20: #{tpu_custom_call.1} parent=1 // pred_region
      %135 = vsyncadd [#allocation4], 0
      %s137 = sshll.u32 [#allocation3], 4
      %s138 = int_to_ptr.vmem [resolvable:$true] %s137
      %s139 = sshll.u32 %s2, 4
      %s140 = int_to_ptr.hbm [resolvable:$true] %s139
      %142 = dma.vmem_to_hbm [thread:$0]  %s138, 128, %s140, [#allocation4]
    $region21: #{tpu_custom_call.1} parent=1 // pred_fallthru
      _
    // Predicated region
    $region22: #{tpu_custom_call.1} parent=1 // pred_check
      _
    $region23: #{tpu_custom_call.1} parent=1 // pred_check_branch
      %144 = sbr.rel (0) target = $region25
    $region24: #{tpu_custom_call.1} parent=1 // pred_region
      %146 = dma.done [#allocation4], 128
    $region25: #{tpu_custom_call.1} parent=1 // pred_fallthru
      _
    %147 = vsyncpa [#allocation4], 1

</llo_original>
